<compile_context>
chip_gen: v5e
topology: v5e:2x2
jax: 0.10.0
libtpu: 0.0.40
codegen_flags: <defaults>
</compile_context>

<pallas_src>
import functools
import math

import jax
import jax.numpy as jnp
from jax.experimental import pallas as pl
from jax.experimental.pallas import tpu as pltpu


def _conv1d_kernel(x_ref, w_ref, o_ref, xpad_ref, *, padding, k_eff, l, l_out):
    # x_ref:    (BB, 1, L)       waveform block for this grid step
    # w_ref:    (C_out, K_eff)   full filter bank (constant index_map -> fetched once)
    # o_ref:    (BB, C_out, L_out)
    # xpad_ref: (BB, 1, L_pad)   VMEM scratch holding zero-padded waveforms
    bb = x_ref.shape[0]

    # In-kernel halo handling (replaces a whole-array jnp.pad pass over HBM):
    # zero the 2*padding halo lanes and write the block into the middle.
    if padding:
        halo = jnp.zeros((bb, 1, padding), jnp.float32)
        xpad_ref[:, :, 0:padding] = halo
        xpad_ref[:, :, padding + l:] = halo
    xpad_ref[:, :, padding:padding + l] = x_ref[...].astype(jnp.float32)

    w = w_ref[...].astype(jnp.float32)                      # (C_out, K_eff), tiny

    # Unrolled shift-multiply-accumulate over the K_eff taps (cross-correlation,
    # matching F.conv1d).  (BB,1,L_out) * (1,C_out,1) -> (BB,C_out,L_out) on the
    # VPU.  Accumulator is initialized with tap 0 instead of zeros + add.
    acc = xpad_ref[:, :, 0:l_out] * w[:, 0:1][None, :, :]
    for k in range(1, k_eff):
        acc = acc + xpad_ref[:, :, k:k + l_out] * w[:, k:k + 1][None, :, :]

    o_ref[...] = acc.astype(o_ref.dtype)


def _pick_batch_block(b, l_pad, c_out, l_out, *, vmem_budget_bytes=12 * 1024 * 1024):
    # Approximate f32 VMEM bytes live per batch row:
    #   double-buffered input tile + padded scratch (each row occupies a full
    #   8-sublane tile because of the singleton channel axis), plus
    #   double-buffered output tile and the accumulator values.
    row_bytes = 4 * (3 * 8 * l_pad + 3 * c_out * l_out)
    bb = max(1, vmem_budget_bytes // max(row_bytes, 1))
    bb = min(bb, 1024, b)
    # Keep >=2 grid steps for larger batches so the "parallel" axis can be
    # split across the two TensorCores on v7x (no effect on v5e/v6e).
    if b >= 16:
        bb = min(bb, pl.cdiv(b, 2))
    return bb


def conv1d_no_bias_forward(waveforms, weight, *, padding=1):
    """waveforms: (B, 1, L); weight: (C_out, K_eff) with K_eff = kernel_size - 1.

    Returns (B, C_out, L_out), L_out = L + 2*padding - K_eff + 1, matching
    F.conv1d(waveforms, weight.view(C_out, 1, K_eff), stride=1, padding=1,
             dilation=1, bias=None, groups=1).
    """
    b, in_ch, l = waveforms.shape
    if in_ch != 1:
        raise ValueError("conv1d_no_bias only supports one input channel")
    c_out, k_eff = weight.shape
    l_pad = l + 2 * padding
    l_out = l_pad - k_eff + 1

    x = waveforms.astype(jnp.float32)
    w = weight.astype(jnp.float32)

    bb = _pick_batch_block(b, l_pad, c_out, l_out)
    grid = (pl.cdiv(b, bb),)

    kernel = functools.partial(
        _conv1d_kernel, padding=padding, k_eff=k_eff, l=l, l_out=l_out)

    out = pl.pallas_call(
        kernel,
        out_shape=jax.ShapeDtypeStruct((b, c_out, l_out), jnp.float32),
        grid_spec=pltpu.PrefetchScalarGridSpec(
            num_scalar_prefetch=0,
            grid=grid,
            in_specs=[
                pl.BlockSpec((bb, 1, l), lambda i: (i, 0, 0)),
                pl.BlockSpec((c_out, k_eff), lambda i: (0, 0)),
            ],
            out_specs=pl.BlockSpec((bb, c_out, l_out), lambda i: (i, 0, 0)),
            scratch_shapes=[pltpu.VMEM((bb, 1, l_pad), jnp.float32)],
        ),
        compiler_params=pltpu.CompilerParams(
            dimension_semantics=("parallel",),
            vmem_limit_bytes=32 * 1024 * 1024,
        ),
    )(x, w)
    return out


def init_weight(key, out_channels, kernel_size):
    """Deterministic stand-in for torch.nn.init.kaiming_uniform_(mode='fan_in')
    on a (out_channels, kernel_size - 1) tensor."""
    k_eff = kernel_size - 1
    fan_in = k_eff
    bound = math.sqrt(6.0 / fan_in)  # gain=sqrt(2), bound = gain*sqrt(3/fan_in)
    return jax.random.uniform(
        key, (out_channels, k_eff), jnp.float32, minval=-bound, maxval=bound)


if __name__ == "__main__":
    # Small shapes consistent with the module's forward: (B, 1, L) waveforms.
    B, L = 2, 16
    out_channels, kernel_size = 8, 4      # effective filter length K_eff = 3
    padding = 1

    key = jax.random.PRNGKey(0)
    kx, kw = jax.random.split(key)
    waveforms = jax.random.normal(kx, (B, 1, L), jnp.float32)
    weight = init_weight(kw, out_channels, kernel_size)

    out = conv1d_no_bias_forward(waveforms, weight, padding=padding)
    out = jax.block_until_ready(out)

    # Pure-JAX reference (cross-correlation, same semantics as F.conv1d).
    k_eff = kernel_size - 1
    l_out = L + 2 * padding - k_eff + 1
    x_pad = jnp.pad(waveforms, ((0, 0), (0, 0), (padding, padding)))
    ref = jnp.zeros((B, out_channels, l_out), jnp.float32)
    for k in range(k_eff):
        ref = ref + weight[None, :, k:k + 1] * x_pad[:, :, k:k + l_out]

    assert out.shape == (B, out_channels, l_out), out.shape
    assert jnp.allclose(out, ref, atol=1e-5, rtol=1e-5), "mismatch vs reference"
    print("KERNEL_OK")
</pallas_src>

<mosaic_0001>
module attributes {stable_mosaic.version = 11 : i64} {
  func.func @_conv1d_kernel(%arg0: i32, %arg1: memref<2x1x16xf32, #tpu.memory_space<vmem>>, %arg2: memref<8x3xf32, #tpu.memory_space<vmem>>, %arg3: memref<2x8x16xf32, #tpu.memory_space<vmem>>, %arg4: memref<2x1x18xf32, #tpu.memory_space<vmem>>) attributes {dimension_semantics = [#tpu.dimension_semantics<parallel>], iteration_bounds = array<i64: 1>, scalar_prefetch = 0 : i64, scratch_operands = 1 : i64, tpu.core_type = #tpu.core_type<tc>, window_params = [{transform_indices = @transform_0, window_bounds = array<i64: 2, 1, 16>}, {pipeline_mode = #tpu.pipeline_mode<synchronous>, transform_indices = @transform_1, window_bounds = array<i64: 8, 3>}, {transform_indices = @transform_2, window_bounds = array<i64: 2, 8, 16>}]} {
    %cst = arith.constant 0.000000e+00 : f32
    %0 = vector.broadcast %cst : f32 to vector<2x1x1xf32>
    %c0 = arith.constant 0 : index
    %c0_0 = arith.constant 0 : index
    %c0_1 = arith.constant 0 : index
    %1 = vector.load %arg4[%c0, %c0_0, %c0_1] : memref<2x1x18xf32, #tpu.memory_space<vmem>>, vector<2x1x1xf32>
    tpu.vector_store %arg4[%c0, %c0_0, %c0_1], %0 {strides = array<i32>} : memref<2x1x18xf32, #tpu.memory_space<vmem>>, vector<2x1x1xf32>,
    %c0_2 = arith.constant 0 : index
    %c0_3 = arith.constant 0 : index
    %c17 = arith.constant 17 : index
    %2 = vector.load %arg4[%c0_2, %c0_3, %c17] : memref<2x1x18xf32, #tpu.memory_space<vmem>>, vector<2x1x1xf32>
    tpu.vector_store %arg4[%c0_2, %c0_3, %c17], %0 {strides = array<i32>} : memref<2x1x18xf32, #tpu.memory_space<vmem>>, vector<2x1x1xf32>,
    %c0_4 = arith.constant 0 : index
    %c0_5 = arith.constant 0 : index
    %c0_6 = arith.constant 0 : index
    %3 = vector.load %arg1[%c0_4, %c0_5, %c0_6] : memref<2x1x16xf32, #tpu.memory_space<vmem>>, vector<2x1x16xf32>
    %c0_7 = arith.constant 0 : index
    %c0_8 = arith.constant 0 : index
    %c1 = arith.constant 1 : index
    %4 = vector.load %arg4[%c0_7, %c0_8, %c1] : memref<2x1x18xf32, #tpu.memory_space<vmem>>, vector<2x1x16xf32>
    tpu.vector_store %arg4[%c0_7, %c0_8, %c1], %3 {strides = array<i32>} : memref<2x1x18xf32, #tpu.memory_space<vmem>>, vector<2x1x16xf32>,
    %c0_9 = arith.constant 0 : index
    %c0_10 = arith.constant 0 : index
    %5 = vector.load %arg2[%c0_9, %c0_10] : memref<8x3xf32, #tpu.memory_space<vmem>>, vector<8x3xf32>
    %c0_11 = arith.constant 0 : index
    %c0_12 = arith.constant 0 : index
    %c0_13 = arith.constant 0 : index
    %6 = vector.load %arg4[%c0_11, %c0_12, %c0_13] : memref<2x1x18xf32, #tpu.memory_space<vmem>>, vector<2x1x16xf32>
    %7 = vector.extract_strided_slice %5 {offsets = [0, 0], sizes = [8, 1], strides = [1, 1]} : vector<8x3xf32> to vector<8x1xf32>
    %8 = vector.shape_cast %7 : vector<8x1xf32> to vector<1x8x1xf32>
    %9 = vector.broadcast %6 : vector<2x1x16xf32> to vector<2x8x16xf32>
    %10 = vector.broadcast %8 : vector<1x8x1xf32> to vector<2x8x16xf32>
    %11 = arith.mulf %9, %10 : vector<2x8x16xf32>
    %c0_14 = arith.constant 0 : index
    %c0_15 = arith.constant 0 : index
    %c1_16 = arith.constant 1 : index
    %12 = vector.load %arg4[%c0_14, %c0_15, %c1_16] : memref<2x1x18xf32, #tpu.memory_space<vmem>>, vector<2x1x16xf32>
    %13 = vector.extract_strided_slice %5 {offsets = [0, 1], sizes = [8, 1], strides = [1, 1]} : vector<8x3xf32> to vector<8x1xf32>
    %14 = vector.shape_cast %13 : vector<8x1xf32> to vector<1x8x1xf32>
    %15 = vector.broadcast %12 : vector<2x1x16xf32> to vector<2x8x16xf32>
    %16 = vector.broadcast %14 : vector<1x8x1xf32> to vector<2x8x16xf32>
    %17 = arith.mulf %15, %16 : vector<2x8x16xf32>
    %18 = arith.addf %11, %17 : vector<2x8x16xf32>
    %c0_17 = arith.constant 0 : index
    %c0_18 = arith.constant 0 : index
    %c2 = arith.constant 2 : index
    %19 = vector.load %arg4[%c0_17, %c0_18, %c2] : memref<2x1x18xf32, #tpu.memory_space<vmem>>, vector<2x1x16xf32>
    %20 = vector.extract_strided_slice %5 {offsets = [0, 2], sizes = [8, 1], strides = [1, 1]} : vector<8x3xf32> to vector<8x1xf32>
    %21 = vector.shape_cast %20 : vector<8x1xf32> to vector<1x8x1xf32>
    %22 = vector.broadcast %19 : vector<2x1x16xf32> to vector<2x8x16xf32>
    %23 = vector.broadcast %21 : vector<1x8x1xf32> to vector<2x8x16xf32>
    %24 = arith.mulf %22, %23 : vector<2x8x16xf32>
    %25 = arith.addf %18, %24 : vector<2x8x16xf32>
    %c0_19 = arith.constant 0 : index
    %c0_20 = arith.constant 0 : index
    %c0_21 = arith.constant 0 : index
    %26 = vector.load %arg3[%c0_19, %c0_20, %c0_21] : memref<2x8x16xf32, #tpu.memory_space<vmem>>, vector<2x8x16xf32>
    tpu.vector_store %arg3[%c0_19, %c0_20, %c0_21], %25 {strides = array<i32>} : memref<2x8x16xf32, #tpu.memory_space<vmem>>, vector<2x8x16xf32>,
    return
  }
  func.func @transform_0(%arg0: i32) -> (i32, i32, i32) {
    %c0_i32 = arith.constant 0 : i32
    %c0_i32_0 = arith.constant 0 : i32
    %c0_i32_1 = arith.constant 0 : i32
    return %arg0, %c0_i32, %c0_i32_0 : i32, i32, i32
  }
  func.func @transform_1(%arg0: i32) -> (i32, i32) {
    %c0_i32 = arith.constant 0 : i32
    %c0_i32_0 = arith.constant 0 : i32
    %c0_i32_1 = arith.constant 0 : i32
    return %c0_i32, %c0_i32_0 : i32, i32
  }
  func.func @transform_2(%arg0: i32) -> (i32, i32, i32) {
    %c0_i32 = arith.constant 0 : i32
    %c0_i32_0 = arith.constant 0 : i32
    %c0_i32_1 = arith.constant 0 : i32
    return %arg0, %c0_i32, %c0_i32_0 : i32, i32, i32
  }
}

</mosaic_0001>

<llo_original>
// kernel: tpu_custom_call.1
$region0: #{tpu_custom_call.1}
  #allocation0 [shape = 'u32[]', space=smem, size = 0x4, offset = 0x4, fixed_abs, tag = 'smem constant byte address 0x4 - core index']
  #allocation1 [shape = 'u32[72,128]{1,0:T(1,128)}', space=vmem, size = 0x9000, scoped, tag = 'internal scratch']
  #allocation2 [shape = 'f32[2,1,18]{2,1,0:T(1,128)}', space=vmem, size = 0x400, scoped, tag = 'scratch operand']
  %s0 = inlined_call_operand.vmem [shape: f32[2,1,16], index: 0, kind: input, shape index: {}]
  %s1 = inlined_call_operand.vmem [shape: f32[8,3], index: 1, kind: input, shape index: {}]
  %s2 = inlined_call_operand.hbm [shape: f32[2,8,16], index: 2, kind: output, shape index: {}]
  %s3 = sld [smem:[#allocation0]]
  $region18: #{tpu_custom_call.1} parent=0
    _
  %s5 = ssub.s32 1, %s3
  %s6 = scalar_select 0, %s5, %s3
  $region1: #{tpu_custom_call.1} parent=0
    #allocation3 [shape = 'u8[8192]{0}', space=vmem, size = 0x2000, scoped, tag = 'output window, operand 0, single buffered']
    #allocation4 [shape = 's32[1]{0}', space=sflag, size = 0x4, scoped, tag = 'scoped memory for tpu_custom_call.1']
    %7 = vsyncpa [#allocation4], 0
    // Predicated region
    $region2: #{tpu_custom_call.1} parent=1 // pred_check
      _
    $region3: #{tpu_custom_call.1} parent=1 // pred_check_branch
      %9 = sbr.rel (0) target = $region5
    $region4: #{tpu_custom_call.1} parent=1 // pred_region
      _
    $region5: #{tpu_custom_call.1} parent=1 // pred_fallthru
      _
    // Predicated region
    $region6: #{tpu_custom_call.1} parent=1 // pred_check
      _
    $region7: #{tpu_custom_call.1} parent=1 // pred_check_branch
      %11 = sbr.rel (0) target = $region9
    $region8: #{tpu_custom_call.1} parent=1 // pred_region
      _
    $region9: #{tpu_custom_call.1} parent=1 // pred_fallthru
      _
    %vm12 = vcmask 0
    %13 = vst.msk [vmem:[#allocation2] sm:$0x1] %vm12, 0.0
    %14 = vst.msk [vmem:[#allocation2 + $0x1] sm:$0x1] %vm12, 0.0
    %vm15 = vcmask 139400
    %16 = vst.msk [vmem:[#allocation2] sm:$0x1] %vm15, 0.0
    %17 = vst.msk [vmem:[#allocation2 + $0x1] sm:$0x1] %vm15, 0.0
    %v18 = vld [vmem:[%s0] sm:$0x1]
    %v19 = vld [vmem:[%s0 + $0x1] sm:$0x1]
    %v22 = vperm.slane %v18, 0
    %v23 = vperm.slane %v19, 0
    %24 = vrot.lane.b32.xlu0 %v22, 1
    %v25 = vpop.permute.xlu0 %24
    %26 = vrot.lane.b32.xlu0 %v23, 1
    %v27 = vpop.permute.xlu0 %26
    %vm30 = vcmask 131080
    %31 = vst.msk [vmem:[#allocation2] sm:$0x1] %vm30, %v25
    %32 = vst.msk [vmem:[#allocation2 + $0x1] sm:$0x1] %vm30, %v27
    %v33 = vld [vmem:[%s1] sm:$0xff]
    %v34 = vld [vmem:[#allocation2] sm:$0x1]
    %v35 = vld [vmem:[#allocation2 + $0x1] sm:$0x1]
    %v38 = vperm.slane %v34, 0
    %v39 = vperm.slane %v35, 0
    %43 = vset.pattern.permute.xlu0 0
    %44 = vperm.xlu0 %43, %v33
    %v45 = vpop.permute.xlu0 %44
    %v47 = vmul.f32 %v38, %v45
    %v48 = vmul.f32 %v39, %v45
    %49 = vset.pattern.permute.xlu0 1
    %50 = vperm.xlu0 %49, %v33
    %v51 = vpop.permute.xlu0 %50
    %v53 = vmul.f32 %v38, %v51
    %v54 = vmul.f32 %v39, %v51
    %57 = vrot.lane.b32.xlu0 %v53, 127
    %v58 = vpop.permute.xlu0 %57
    %59 = vrot.lane.b32.xlu0 %v54, 127
    %v60 = vpop.permute.xlu0 %59
    %v63 = vadd.f32 %v47, %v58
    %v64 = vadd.f32 %v48, %v60
    %65 = vset.pattern.permute.xlu0 2
    %66 = vperm.xlu0 %65, %v33
    %v67 = vpop.permute.xlu0 %66
    %v69 = vmul.f32 %v38, %v67
    %v70 = vmul.f32 %v39, %v67
    %73 = vrot.lane.b32.xlu0 %v69, 126
    %v74 = vpop.permute.xlu0 %73
    %75 = vrot.lane.b32.xlu0 %v70, 126
    %v76 = vpop.permute.xlu0 %75
    %v79 = vadd.f32 %v63, %v74
    %v80 = vadd.f32 %v64, %v76
    %vm81 = vcmask 130048
    %82 = vst.msk [vmem:[#allocation3] sm:$0xff] %vm81, %v79
    %83 = vst.msk [vmem:[#allocation3 + $0x8] sm:$0xff] %vm81, %v80
    // Predicated region
    $region10: #{tpu_custom_call.1} parent=1 // pred_check
      _
    $region11: #{tpu_custom_call.1} parent=1 // pred_check_branch
      %85 = sbr.rel (0) target = $region13
    $region12: #{tpu_custom_call.1} parent=1 // pred_region
      %87 = vsyncadd [#allocation4], 0
      %s88 = sshll.u32 [#allocation3], 4
      %s89 = int_to_ptr.vmem [resolvable:$true] %s88
      %s90 = sshll.u32 %s2, 4
      %s91 = int_to_ptr.hbm [resolvable:$true] %s90
      %96 = dma.vmem_to_hbm [thread:$0]  %s89, 256, %s91, [#allocation4], 128, 128, 8
    $region13: #{tpu_custom_call.1} parent=1 // pred_fallthru
      _
    // Predicated region
    $region14: #{tpu_custom_call.1} parent=1 // pred_check
      _
    $region15: #{tpu_custom_call.1} parent=1 // pred_check_branch
      %98 = sbr.rel (0) target = $region17
    $region16: #{tpu_custom_call.1} parent=1 // pred_region
      %100 = dma.done [#allocation4], 256
    $region17: #{tpu_custom_call.1} parent=1 // pred_fallthru
      _
    %101 = vsyncpa [#allocation4], 1

</llo_original>
